<compile_context>
chip_gen: v7x
topology: tpu7x:2x2x1
jax: 0.10.0
libtpu: 0.0.40
codegen_flags: <defaults>
</compile_context>

<pallas_src>
import jax
import jax.numpy as jnp
from jax.experimental import pallas as pl
from jax.experimental.pallas import tpu as pltpu

BN_EPS = 1e-5

_VMEM_TILE_TARGET = 28 * 1024 * 1024   # working-set target; leaves big headroom on v7x (64 MiB)
_VMEM_LIMIT_CAP = 48 * 1024 * 1024     # never claim more than this (safe on v5e/v6e/v7x)


def _make_seg_head_kernel(num_features):
    def kernel(*refs):
        x_refs = refs[:num_features]
        w1t_ref, w2t_ref, b2_ref, out_ref = refs[num_features:]

        # Virtual channel-concat: stack the per-feature (ch, tp) tiles along the
        # sublane axis and run ONE MXU contraction over Cin = ch * F.  The
        # accumulation over features happens inside the MXU contraction, not as
        # a chain of VPU adds over a (C, tp) f32 intermediate.
        if num_features > 1:
            x_cat = jnp.concatenate([r[0] for r in x_refs], axis=0)    # (Cin, tp)
        else:
            x_cat = x_refs[0][0]

        acc = jnp.dot(w1t_ref[...], x_cat,
                      preferred_element_type=jnp.float32)              # (C, tp) f32
        h = jnp.maximum(acc, 0.0)     # ReLU kept in f32 (v5e VPU has no bf16 path)

        # Predict 1x1 conv with eval-mode BatchNorm pre-folded into (w2', b2').
        # MXU operands in the compute dtype (bf16 by default); accumulation and
        # the bias add stay f32.
        out = jnp.dot(w2t_ref[...], h.astype(w2t_ref.dtype),
                      preferred_element_type=jnp.float32) + b2_ref[...]
        out_ref[0] = out.astype(out_ref.dtype)

    return kernel


def _vmem_bytes(num_features, ch, C, Cin, K, tp, in_itemsize, out_itemsize,
                feature_buffering):
    """Estimate of the pipelined VMEM working set for one grid step."""
    feat = feature_buffering * num_features * ch * tp * in_itemsize    # pipelined feature tiles
    outb = 2 * K * tp * out_itemsize                                   # double-buffered output tile
    wgts = 2 * ((C * Cin + K * C) * in_itemsize + K * 4)               # weights (default 2-deep)
    interm = (Cin * tp * in_itemsize          # stacked feature operand
              + 2 * C * tp * 4                # f32 fuse accumulator + ReLU value
              + C * tp * in_itemsize          # cast of h fed to the 2nd matmul
              + K * tp * 4)                   # f32 predict accumulator before store cast
    return feat + outb + wgts + interm


def seg_head_forward(features, params, *, tile_p=2048,
                     compute_dtype=jnp.bfloat16, out_dtype=None,
                     feature_buffering=2):
    """features: list of (N, C, H, W) arrays. Returns (N, num_classes, H, W).

    compute_dtype: dtype of the MXU operands for both matmuls (accumulation is
        always f32).  Default bf16 (the kernel is HBM-bandwidth bound; bf16
        halves the dominant activation read stream).  Pass None for an all-f32
        path (tight-tolerance validation).
    out_dtype: dtype of the stored output; default = features dtype.
    feature_buffering: pipeline depth for the feature input tiles (2 = default
        double buffering; 3 can help hide DMA setup for small P on v6e).
    """
    w1 = params["fuse_w"]        # (Cin, C), Cin = channels * num_features
    gamma = params["bn_gamma"]   # (1, C)
    beta = params["bn_beta"]     # (1, C)
    mean = params["bn_mean"]     # (1, C)
    var = params["bn_var"]       # (1, C)
    w2 = params["pred_w"]        # (C, K)
    b2 = params["pred_b"]        # (1, K)

    num_features = len(features)
    N, ch, H, W = features[0].shape
    Cin, C = w1.shape
    K = w2.shape[1]
    assert Cin == ch * num_features
    P = H * W
    out_dtype = features[0].dtype if out_dtype is None else out_dtype

    # Free reshapes of the NCHW layout (no transpose / concat HBM traffic).
    xs = [f.reshape(N, ch, P) for f in features]

    # Fuse weight, transposed for the (C, Cin) @ (Cin, tp) contraction.
    w1t = w1.T                                                     # (C, Cin)

    # Fold eval-mode BatchNorm (applied AFTER ReLU, per this module's
    # Sequential(Conv, ReLU, BatchNorm)) into the predict conv:
    #   y = h*scale + shift ; out = W2^T y + b2 = (W2^T * scale) h + (W2^T shift + b2)
    scale = gamma * jax.lax.rsqrt(var + BN_EPS)                    # (1, C)
    shift = beta - mean * scale                                    # (1, C)
    w2t_eff = w2.T * scale                                         # (K, C)
    b2_eff = jnp.sum(w2.T * shift, axis=1, keepdims=True) + b2.T   # (K, 1)  (stays f32)

    if compute_dtype is not None:
        # bf16 (default): halves the dominant HBM read stream and feeds the MXU
        # native bf16 operands.  Accumulation / bias / ReLU remain f32.
        xs = [x.astype(compute_dtype) for x in xs]
        w1t = w1t.astype(compute_dtype)
        w2t_eff = w2t_eff.astype(compute_dtype)
    b2_eff = b2_eff.astype(jnp.float32)

    in_itemsize = jnp.dtype(xs[0].dtype).itemsize
    out_itemsize = jnp.dtype(out_dtype).itemsize

    # Pixel tile: as large as possible (lane-dense, few grid steps). Must be a
    # multiple of 128 unless it spans the full pixel extent.  Auto-shrink if
    # the derived VMEM working set would exceed the target (v7x: 64 MiB/core).
    if P > tile_p:
        tp = tile_p
        assert tp % 128 == 0, "tile_p must be a multiple of 128"
        while (tp > 256 and tp % 256 == 0 and
               _vmem_bytes(num_features, ch, C, Cin, K, tp, in_itemsize,
                           out_itemsize, feature_buffering) > _VMEM_TILE_TARGET):
            tp //= 2
    else:
        tp = P                           # full extent is always a legal block dim

    vmem_need = _vmem_bytes(num_features, ch, C, Cin, K, tp, in_itemsize,
                            out_itemsize, feature_buffering)
    vmem_limit = int(min(max(vmem_need * 1.25 + (2 << 20), 8 << 20),
                         _VMEM_LIMIT_CAP))

    grid = (N, pl.cdiv(P, tp))           # ragged tail handled by blocked pipelining

    feat_kwargs = {}
    if feature_buffering != 2:
        feat_kwargs["pipeline_mode"] = pl.Buffered(feature_buffering)
    feat_spec = pl.BlockSpec((1, ch, tp), lambda n, p: (n, 0, p), **feat_kwargs)
    full2 = lambda n, p: (0, 0)

    out = pl.pallas_call(
        _make_seg_head_kernel(num_features),
        out_shape=jax.ShapeDtypeStruct((N, K, P), out_dtype),
        grid_spec=pltpu.PrefetchScalarGridSpec(
            num_scalar_prefetch=0,
            grid=grid,
            in_specs=[feat_spec] * num_features + [
                pl.BlockSpec((C, Cin), full2),   # fuse weight (resident; constant index_map)
                pl.BlockSpec((K, C), full2),     # BN-folded predict weight
                pl.BlockSpec((K, 1), full2),     # BN-folded predict bias (f32)
            ],
            out_specs=pl.BlockSpec((1, K, tp), lambda n, p: (n, 0, p)),
        ),
        compiler_params=pltpu.CompilerParams(
            dimension_semantics=("parallel", "parallel"),
            vmem_limit_bytes=vmem_limit,
        ),
    )(*xs, w1t, w2t_eff, b2_eff)

    # (N, K, P) is already NCHW pixel order -> plain (free) reshape, no transpose.
    return out.reshape(N, K, H, W)


def make_params(key, channels, num_classes, num_features):
    cin = channels * num_features
    k1, k2, k3, k4, k5, k6, k7 = jax.random.split(key, 7)
    return {
        # Conv2d(cin, channels, 1, bias=False).weight is (channels, cin, 1, 1);
        # stored here already transposed as (cin, channels) for x @ W.
        "fuse_w": jax.random.normal(k1, (cin, channels), jnp.float32) * 0.1,
        "bn_gamma": jax.random.normal(k2, (1, channels), jnp.float32) * 0.1 + 1.0,
        "bn_beta": jax.random.normal(k3, (1, channels), jnp.float32) * 0.1,
        "bn_mean": jax.random.normal(k4, (1, channels), jnp.float32) * 0.1,
        "bn_var": jax.random.uniform(k5, (1, channels), jnp.float32, 0.5, 1.5),
        "pred_w": jax.random.normal(k6, (channels, num_classes), jnp.float32) * 0.1,
        "pred_b": jax.random.normal(k7, (1, num_classes), jnp.float32) * 0.1,
    }


def _reference(features, p):
    x = jnp.concatenate(features, axis=1)
    N, Cin, H, W = x.shape
    xf = jnp.transpose(x, (0, 2, 3, 1)).reshape(-1, Cin)
    h = jnp.maximum(xf @ p["fuse_w"], 0.0)
    h = (h - p["bn_mean"]) * jax.lax.rsqrt(p["bn_var"] + BN_EPS) * p["bn_gamma"] + p["bn_beta"]
    o = h @ p["pred_w"] + p["pred_b"]
    K = o.shape[-1]
    return jnp.transpose(o.reshape(N, H, W, K), (0, 3, 1, 2))


if __name__ == "__main__":
    # small shapes consistent with the module
    batch, channels, H, W = 2, 8, 16, 16
    num_classes, num_features = 8, 4

    key = jax.random.PRNGKey(0)
    kf, kp = jax.random.split(key)
    feat_keys = jax.random.split(kf, num_features)
    features = [jax.random.normal(k, (batch, channels, H, W), jnp.float32)
                for k in feat_keys]
    params = make_params(kp, channels, num_classes, num_features)

    ref = _reference(features, params)

    # All-f32 path: tight correctness check against the JAX reference.
    out_f32 = jax.block_until_ready(
        seg_head_forward(features, params, compute_dtype=None))
    assert out_f32.shape == (batch, num_classes, H, W)
    assert jnp.allclose(out_f32, ref, atol=5e-4, rtol=5e-4), "f32 mismatch vs reference"

    # Default path: bf16 MXU operands, f32 accumulation (mem-bound fast path).
    out_bf16 = jax.block_until_ready(seg_head_forward(features, params))
    assert out_bf16.shape == (batch, num_classes, H, W)
    assert jnp.allclose(out_bf16, ref, atol=5e-2, rtol=5e-2), "bf16 mismatch vs reference"

    # TODO(synk): BatchNorm2d implemented in eval mode (running stats, folded
    # into the predict conv); PyTorch default-training-mode batch statistics
    # are not reproduced here.  Note this module applies ReLU BEFORE BatchNorm
    # (per its nn.Sequential order), and the kernel matches that order.
    print("KERNEL_OK")
</pallas_src>

<mosaic_0001>
module attributes {stable_mosaic.version = 11 : i64} {
  func.func @kernel(%arg0: i32, %arg1: i32, %arg2: memref<1x8x256xf32, #tpu.memory_space<vmem>>, %arg3: memref<1x8x256xf32, #tpu.memory_space<vmem>>, %arg4: memref<1x8x256xf32, #tpu.memory_space<vmem>>, %arg5: memref<1x8x256xf32, #tpu.memory_space<vmem>>, %arg6: memref<8x32xf32, #tpu.memory_space<vmem>>, %arg7: memref<8x8xf32, #tpu.memory_space<vmem>>, %arg8: memref<8x1xf32, #tpu.memory_space<vmem>>, %arg9: memref<1x8x256xf32, #tpu.memory_space<vmem>>) attributes {dimension_semantics = [#tpu.dimension_semantics<parallel>, #tpu.dimension_semantics<parallel>], iteration_bounds = array<i64: 2, 1>, scalar_prefetch = 0 : i64, scratch_operands = 0 : i64, tpu.core_type = #tpu.core_type<tc>, window_params = [{transform_indices = @transform_0, window_bounds = array<i64: 1, 8, 256>}, {transform_indices = @transform_1, window_bounds = array<i64: 1, 8, 256>}, {transform_indices = @transform_2, window_bounds = array<i64: 1, 8, 256>}, {transform_indices = @transform_3, window_bounds = array<i64: 1, 8, 256>}, {pipeline_mode = #tpu.pipeline_mode<synchronous>, transform_indices = @transform_4, window_bounds = array<i64: 8, 32>}, {pipeline_mode = #tpu.pipeline_mode<synchronous>, transform_indices = @transform_5, window_bounds = array<i64: 8, 8>}, {pipeline_mode = #tpu.pipeline_mode<synchronous>, transform_indices = @transform_6, window_bounds = array<i64: 8, 1>}, {transform_indices = @transform_7, window_bounds = array<i64: 1, 8, 256>}]} {
    %c0 = arith.constant 0 : index
    %c0_0 = arith.constant 0 : index
    %c0_1 = arith.constant 0 : index
    %0 = vector.load %arg2[%c0, %c0_0, %c0_1] : memref<1x8x256xf32, #tpu.memory_space<vmem>>, vector<1x8x256xf32>
    %1 = vector.shape_cast %0 : vector<1x8x256xf32> to vector<8x256xf32>
    %c0_2 = arith.constant 0 : index
    %c0_3 = arith.constant 0 : index
    %c0_4 = arith.constant 0 : index
    %2 = vector.load %arg3[%c0_2, %c0_3, %c0_4] : memref<1x8x256xf32, #tpu.memory_space<vmem>>, vector<1x8x256xf32>
    %3 = vector.shape_cast %2 : vector<1x8x256xf32> to vector<8x256xf32>
    %c0_5 = arith.constant 0 : index
    %c0_6 = arith.constant 0 : index
    %c0_7 = arith.constant 0 : index
    %4 = vector.load %arg4[%c0_5, %c0_6, %c0_7] : memref<1x8x256xf32, #tpu.memory_space<vmem>>, vector<1x8x256xf32>
    %5 = vector.shape_cast %4 : vector<1x8x256xf32> to vector<8x256xf32>
    %c0_8 = arith.constant 0 : index
    %c0_9 = arith.constant 0 : index
    %c0_10 = arith.constant 0 : index
    %6 = vector.load %arg5[%c0_8, %c0_9, %c0_10] : memref<1x8x256xf32, #tpu.memory_space<vmem>>, vector<1x8x256xf32>
    %7 = vector.shape_cast %6 : vector<1x8x256xf32> to vector<8x256xf32>
    %8 = tpu.concatenate %1, %3, %5, %7 in 0 : vector<8x256xf32>, vector<8x256xf32>, vector<8x256xf32>, vector<8x256xf32> -> vector<32x256xf32>
    %c0_11 = arith.constant 0 : index
    %c0_12 = arith.constant 0 : index
    %9 = vector.load %arg6[%c0_11, %c0_12] : memref<8x32xf32, #tpu.memory_space<vmem>>, vector<8x32xf32>
    %cst = arith.constant dense<0.000000e+00> : vector<8x256xf32>
    %10 = tpu.matmul %9, %8, %cst {dimension_numbers = #tpu.dot_dimension_numbers<[1], [0], [0], [1], [0, 0, 1, 1], [], []>} : vector<8x32xf32>, vector<32x256xf32>, vector<8x256xf32> -> vector<8x256xf32>
    %cst_13 = arith.constant 0.000000e+00 : f32
    %11 = vector.broadcast %cst_13 : f32 to vector<8x256xf32>
    %12 = arith.maximumf %10, %11 : vector<8x256xf32>
    %c0_14 = arith.constant 0 : index
    %c0_15 = arith.constant 0 : index
    %13 = vector.load %arg7[%c0_14, %c0_15] : memref<8x8xf32, #tpu.memory_space<vmem>>, vector<8x8xf32>
    %cst_16 = arith.constant dense<0.000000e+00> : vector<8x256xf32>
    %14 = tpu.matmul %13, %12, %cst_16 {dimension_numbers = #tpu.dot_dimension_numbers<[1], [0], [0], [1], [0, 0, 1, 1], [], []>} : vector<8x8xf32>, vector<8x256xf32>, vector<8x256xf32> -> vector<8x256xf32>
    %c0_17 = arith.constant 0 : index
    %c0_18 = arith.constant 0 : index
    %15 = vector.load %arg8[%c0_17, %c0_18] : memref<8x1xf32, #tpu.memory_space<vmem>>, vector<8x1xf32>
    %16 = vector.broadcast %15 : vector<8x1xf32> to vector<8x256xf32>
    %17 = arith.addf %14, %16 : vector<8x256xf32>
    %c0_19 = arith.constant 0 : index
    %c0_20 = arith.constant 0 : index
    %c0_21 = arith.constant 0 : index
    %18 = vector.load %arg9[%c0_19, %c0_20, %c0_21] : memref<1x8x256xf32, #tpu.memory_space<vmem>>, vector<1x8x256xf32>
    %19 = vector.shape_cast %18 : vector<1x8x256xf32> to vector<8x256xf32>
    %20 = vector.shape_cast %17 : vector<8x256xf32> to vector<1x8x256xf32>
    tpu.vector_store %arg9[%c0_19, %c0_20, %c0_21], %20 {strides = array<i32>} : memref<1x8x256xf32, #tpu.memory_space<vmem>>, vector<1x8x256xf32>,
    return
  }
  func.func @transform_0(%arg0: i32, %arg1: i32) -> (i32, i32, i32) {
    %c0_i32 = arith.constant 0 : i32
    %c0_i32_0 = arith.constant 0 : i32
    return %arg0, %c0_i32, %arg1 : i32, i32, i32
  }
  func.func @transform_1(%arg0: i32, %arg1: i32) -> (i32, i32, i32) {
    %c0_i32 = arith.constant 0 : i32
    %c0_i32_0 = arith.constant 0 : i32
    return %arg0, %c0_i32, %arg1 : i32, i32, i32
  }
  func.func @transform_2(%arg0: i32, %arg1: i32) -> (i32, i32, i32) {
    %c0_i32 = arith.constant 0 : i32
    %c0_i32_0 = arith.constant 0 : i32
    return %arg0, %c0_i32, %arg1 : i32, i32, i32
  }
  func.func @transform_3(%arg0: i32, %arg1: i32) -> (i32, i32, i32) {
    %c0_i32 = arith.constant 0 : i32
    %c0_i32_0 = arith.constant 0 : i32
    return %arg0, %c0_i32, %arg1 : i32, i32, i32
  }
  func.func @transform_4(%arg0: i32, %arg1: i32) -> (i32, i32) {
    %c0_i32 = arith.constant 0 : i32
    %c0_i32_0 = arith.constant 0 : i32
    %c0_i32_1 = arith.constant 0 : i32
    return %c0_i32, %c0_i32_0 : i32, i32
  }
  func.func @transform_5(%arg0: i32, %arg1: i32) -> (i32, i32) {
    %c0_i32 = arith.constant 0 : i32
    %c0_i32_0 = arith.constant 0 : i32
    %c0_i32_1 = arith.constant 0 : i32
    return %c0_i32, %c0_i32_0 : i32, i32
  }
  func.func @transform_6(%arg0: i32, %arg1: i32) -> (i32, i32) {
    %c0_i32 = arith.constant 0 : i32
    %c0_i32_0 = arith.constant 0 : i32
    %c0_i32_1 = arith.constant 0 : i32
    return %c0_i32, %c0_i32_0 : i32, i32
  }
  func.func @transform_7(%arg0: i32, %arg1: i32) -> (i32, i32, i32) {
    %c0_i32 = arith.constant 0 : i32
    %c0_i32_0 = arith.constant 0 : i32
    return %arg0, %c0_i32, %arg1 : i32, i32, i32
  }
}

</mosaic_0001>

<llo_original>
// kernel: tpu_custom_call.1
$region0: #{tpu_custom_call.1}
  #allocation0 [shape = 'u32[]', space=smem, size = 0x4, offset = 0x4, fixed_abs, tag = 'smem constant byte address 0x4 - core index']
  #allocation1 [shape = 'u32[144,128]{1,0:T(1,128)}', space=vmem, size = 0x12000, scoped, tag = 'internal scratch']
  %s0 = inlined_call_operand.hbm [shape: f32[2,8,256], index: 0, kind: input, shape index: {}]
  %s1 = inlined_call_operand.hbm [shape: f32[2,8,256], index: 1, kind: input, shape index: {}]
  %s2 = inlined_call_operand.hbm [shape: f32[2,8,256], index: 2, kind: input, shape index: {}]
  %s3 = inlined_call_operand.hbm [shape: f32[2,8,256], index: 3, kind: input, shape index: {}]
  %s4 = inlined_call_operand.vmem [shape: f32[8,32], index: 4, kind: input, shape index: {}]
  %s5 = inlined_call_operand.vmem [shape: f32[8,8], index: 5, kind: input, shape index: {}]
  %s6 = inlined_call_operand.vmem [shape: f32[8,1], index: 6, kind: input, shape index: {}]
  %s7 = inlined_call_operand.hbm [shape: f32[2,8,256], index: 7, kind: output, shape index: {}]
  %s8 = sld [smem:[#allocation0]]
  $region77: #{tpu_custom_call.1} parent=0
    _
  %s10 = ssub.s32 1, %s8
  %s11 = scalar_select 0, %s10, %s8
  $region1: #{tpu_custom_call.1} parent=0
    #allocation2 [shape = 'u8[16384]{0}', space=vmem, size = 0x4000, scoped, tag = 'input window, operand 0']
    #allocation3 [shape = 's32[2]{0}', space=sflag, size = 0x8, scoped, tag = 'scoped memory for tpu_custom_call.1']
    #allocation4 [shape = 's32[2]{0}', space=sflag, size = 0x8, scoped, tag = 'scoped memory for tpu_custom_call.1']
    #allocation5 [shape = 'u8[16384]{0}', space=vmem, size = 0x4000, scoped, tag = 'input window, operand 1']
    #allocation6 [shape = 's32[2]{0}', space=sflag, size = 0x8, scoped, tag = 'scoped memory for tpu_custom_call.1']
    #allocation7 [shape = 'u8[16384]{0}', space=vmem, size = 0x4000, scoped, tag = 'input window, operand 2']
    #allocation8 [shape = 'u8[16384]{0}', space=vmem, size = 0x4000, scoped, tag = 'input window, operand 3']
    #allocation9 [shape = 's32[2]{0}', space=sflag, size = 0x8, scoped, tag = 'scoped memory for tpu_custom_call.1']
    #allocation10 [shape = 'u8[16384]{0}', space=vmem, size = 0x4000, scoped, tag = 'output window, operand 0']
    %12 = vsyncpa [#allocation3], 0
    %s13 = scalar_lea.sflag [#allocation3], 1
    %14 = vsyncpa %s13, 0
    %15 = vsyncpa [#allocation6], 0
    %s16 = scalar_lea.sflag [#allocation6], 1
    %17 = vsyncpa %s16, 0
    %18 = vsyncpa [#allocation9], 0
    %s19 = scalar_lea.sflag [#allocation9], 1
    %20 = vsyncpa %s19, 0
    %21 = vsyncpa [#allocation4], 0
    %s22 = scalar_lea.sflag [#allocation4], 1
    %23 = vsyncpa %s22, 0
    loop: start=0, step=1, limit=4
    $region2: #{tpu_custom_call.1} parent=1 // loop_pre_header
      _
    $region3: #{tpu_custom_call.1} parent=1 // loop_header
      %s25 = sphi 0, %s29
      %p26 = scmp.ge.s32.totalorder %s25, 4
      %s32 = sphi 0, %s44
      %s33 = sphi 0, %s40
      %s34 = sphi 0, %s32
      %s35 = sphi 0, %s33
      %s36 = sphi 0, %s34
      %s37 = sphi 0, %s35
      %s49 = sphi 0, %s51
      %s52 = sphi 0, %s49
      %s53 = sphi 0, %s52
      %s69 = sphi 0, %s53
      %s77 = sphi 0, %s79
      %s80 = sphi 0, %s77
      %s81 = sphi 0, %s80
      %s97 = sphi 0, %s81
      %s105 = sphi 0, %s107
      %s108 = sphi 0, %s105
      %s109 = sphi 0, %s108
      %s125 = sphi 0, %s109
      %s133 = sphi 0, %s135
      %s136 = sphi 0, %s133
      %s137 = sphi 0, %s136
      %s153 = sphi 0, %s137
      %s157 = sphi 0, %s157
      %s159 = sphi 0, %s157
      %s160 = sphi 0, %s159
      %s174 = sphi 0, %s160
      %s178 = sphi 0, %s178
      %s180 = sphi 0, %s178
      %s181 = sphi 0, %s180
      %s195 = sphi 0, %s181
      %s199 = sphi 0, %s199
      %s201 = sphi 0, %s199
      %s202 = sphi 0, %s201
      %s216 = sphi 0, %s202
      %s224 = sphi 0, %s226
      %s227 = sphi 0, %s224
      %s228 = sphi 0, %s227
      %s244 = sphi 0, %s228
    $region4: #{tpu_custom_call.1} parent=1 // loop_header_branch
      %28 = sbr.rel (%p26) target = $region8
    $region5: #{tpu_custom_call.1} parent=1 // loop_body
      %s30 = ssub.s32 %s25, 1
      %s31 = ssub.s32 %s25, 2
      %s38 = sadd.s32 1, %s33
      %p39 = scmp.ge.s32.totalorder %s38, 1
      %s40 = scalar_select %p39, 0, %s38
      %s41 = sadd.s32 1, %s32
      %s42 = scalar_select %p39, %s41, %s32
      %p43 = scmp.ge.s32.totalorder %s42, 2
      %s44 = scalar_select %p43, 0, %s42
      %s45 = ssub.s32 %s32, %s44
      %s46 = ssub.s32 %s33, %s40
      %s47 = sor.u32 %s45, %s46
      %p48 = scmp.eq.s32.totalorder %s47, 0
      %s50 = sadd.s32 %s49, 1
      %s51 = scalar_select %p48, %s49, %s50
      %p54 = pneg %p48
      %p55 = scmp.eq.s32.totalorder %s25, 1
      %p56 = por %p54, %p55
      %p57 = scmp.ne.s32.totalorder %s49, %s52
      %p58 = scmp.eq.s32.totalorder %s25, 0
      %p59 = por %p57, %p58
      %p60 = scmp.ne.s32.totalorder %s49, %s52
      %p61 = scmp.eq.s32.totalorder %s30, 1
      %p62 = por %p60, %p61
      %p63 = scmp.ne.s32.totalorder %s52, %s53
      %p64 = scmp.eq.s32.totalorder %s30, 0
      %p65 = por %p63, %p64
      %p66 = scmp.ne.s32.totalorder %s52, %s53
      %p67 = scmp.eq.s32.totalorder %s31, 1
      %p68 = por %p66, %p67
      %p70 = scmp.ne.s32.totalorder %s53, %s69
      %p71 = scmp.eq.s32.totalorder %s31, 0
      %p72 = por %p70, %p71
      %s73 = ssub.s32 %s32, %s44
      %s74 = ssub.s32 %s33, %s40
      %s75 = sor.u32 %s73, %s74
      %p76 = scmp.eq.s32.totalorder %s75, 0
      %s78 = sadd.s32 %s77, 1
      %s79 = scalar_select %p76, %s77, %s78
      %p82 = pneg %p76
      %p83 = scmp.eq.s32.totalorder %s25, 1
      %p84 = por %p82, %p83
      %p85 = scmp.ne.s32.totalorder %s77, %s80
      %p86 = scmp.eq.s32.totalorder %s25, 0
      %p87 = por %p85, %p86
      %p88 = scmp.ne.s32.totalorder %s77, %s80
      %p89 = scmp.eq.s32.totalorder %s30, 1
      %p90 = por %p88, %p89
      %p91 = scmp.ne.s32.totalorder %s80, %s81
      %p92 = scmp.eq.s32.totalorder %s30, 0
      %p93 = por %p91, %p92
      %p94 = scmp.ne.s32.totalorder %s80, %s81
      %p95 = scmp.eq.s32.totalorder %s31, 1
      %p96 = por %p94, %p95
      %p98 = scmp.ne.s32.totalorder %s81, %s97
      %p99 = scmp.eq.s32.totalorder %s31, 0
      %p100 = por %p98, %p99
      %s101 = ssub.s32 %s32, %s44
      %s102 = ssub.s32 %s33, %s40
      %s103 = sor.u32 %s101, %s102
      %p104 = scmp.eq.s32.totalorder %s103, 0
      %s106 = sadd.s32 %s105, 1
      %s107 = scalar_select %p104, %s105, %s106
      %p110 = pneg %p104
      %p111 = scmp.eq.s32.totalorder %s25, 1
      %p112 = por %p110, %p111
      %p113 = scmp.ne.s32.totalorder %s105, %s108
      %p114 = scmp.eq.s32.totalorder %s25, 0
      %p115 = por %p113, %p114
      %p116 = scmp.ne.s32.totalorder %s105, %s108
      %p117 = scmp.eq.s32.totalorder %s30, 1
      %p118 = por %p116, %p117
      %p119 = scmp.ne.s32.totalorder %s108, %s109
      %p120 = scmp.eq.s32.totalorder %s30, 0
      %p121 = por %p119, %p120
      %p122 = scmp.ne.s32.totalorder %s108, %s109
      %p123 = scmp.eq.s32.totalorder %s31, 1
      %p124 = por %p122, %p123
      %p126 = scmp.ne.s32.totalorder %s109, %s125
      %p127 = scmp.eq.s32.totalorder %s31, 0
      %p128 = por %p126, %p127
      %s129 = ssub.s32 %s32, %s44
      %s130 = ssub.s32 %s33, %s40
      %s131 = sor.u32 %s129, %s130
      %p132 = scmp.eq.s32.totalorder %s131, 0
      %s134 = sadd.s32 %s133, 1
      %s135 = scalar_select %p132, %s133, %s134
      %p138 = pneg %p132
      %p139 = scmp.eq.s32.totalorder %s25, 1
      %p140 = por %p138, %p139
      %p141 = scmp.ne.s32.totalorder %s133, %s136
      %p142 = scmp.eq.s32.totalorder %s25, 0
      %p143 = por %p141, %p142
      %p144 = scmp.ne.s32.totalorder %s133, %s136
      %p145 = scmp.eq.s32.totalorder %s30, 1
      %p146 = por %p144, %p145
      %p147 = scmp.ne.s32.totalorder %s136, %s137
      %p148 = scmp.eq.s32.totalorder %s30, 0
      %p149 = por %p147, %p148
      %p150 = scmp.ne.s32.totalorder %s136, %s137
      %p151 = scmp.eq.s32.totalorder %s31, 1
      %p152 = por %p150, %p151
      %p154 = scmp.ne.s32.totalorder %s137, %s153
      %p155 = scmp.eq.s32.totalorder %s31, 0
      %p156 = por %p154, %p155
      %s158 = sadd.s32 %s157, 1
      %p161 = scmp.eq.s32.totalorder %s25, 1
      %p162 = scmp.ne.s32.totalorder %s157, %s159
      %p163 = scmp.eq.s32.totalorder %s25, 0
      %p164 = por %p162, %p163
      %p165 = scmp.ne.s32.totalorder %s157, %s159
      %p166 = scmp.eq.s32.totalorder %s30, 1
      %p167 = por %p165, %p166
      %p168 = scmp.ne.s32.totalorder %s159, %s160
      %p169 = scmp.eq.s32.totalorder %s30, 0
      %p170 = por %p168, %p169
      %p171 = scmp.ne.s32.totalorder %s159, %s160
      %p172 = scmp.eq.s32.totalorder %s31, 1
      %p173 = por %p171, %p172
      %p175 = scmp.ne.s32.totalorder %s160, %s174
      %p176 = scmp.eq.s32.totalorder %s31, 0
      %p177 = por %p175, %p176
      %s179 = sadd.s32 %s178, 1
      %p182 = scmp.eq.s32.totalorder %s25, 1
      %p183 = scmp.ne.s32.totalorder %s178, %s180
      %p184 = scmp.eq.s32.totalorder %s25, 0
      %p185 = por %p183, %p184
      %p186 = scmp.ne.s32.totalorder %s178, %s180
      %p187 = scmp.eq.s32.totalorder %s30, 1
      %p188 = por %p186, %p187
      %p189 = scmp.ne.s32.totalorder %s180, %s181
      %p190 = scmp.eq.s32.totalorder %s30, 0
      %p191 = por %p189, %p190
      %p192 = scmp.ne.s32.totalorder %s180, %s181
      %p193 = scmp.eq.s32.totalorder %s31, 1
      %p194 = por %p192, %p193
      %p196 = scmp.ne.s32.totalorder %s181, %s195
      %p197 = scmp.eq.s32.totalorder %s31, 0
      %p198 = por %p196, %p197
      %s200 = sadd.s32 %s199, 1
      %p203 = scmp.eq.s32.totalorder %s25, 1
      %p204 = scmp.ne.s32.totalorder %s199, %s201
      %p205 = scmp.eq.s32.totalorder %s25, 0
      %p206 = por %p204, %p205
      %p207 = scmp.ne.s32.totalorder %s199, %s201
      %p208 = scmp.eq.s32.totalorder %s30, 1
      %p209 = por %p207, %p208
      %p210 = scmp.ne.s32.totalorder %s201, %s202
      %p211 = scmp.eq.s32.totalorder %s30, 0
      %p212 = por %p210, %p211
      %p213 = scmp.ne.s32.totalorder %s201, %s202
      %p214 = scmp.eq.s32.totalorder %s31, 1
      %p215 = por %p213, %p214
      %p217 = scmp.ne.s32.totalorder %s202, %s216
      %p218 = scmp.eq.s32.totalorder %s31, 0
      %p219 = por %p217, %p218
      %s220 = ssub.s32 %s32, %s44
      %s221 = ssub.s32 %s33, %s40
      %s222 = sor.u32 %s220, %s221
      %p223 = scmp.eq.s32.totalorder %s222, 0
      %s225 = sadd.s32 %s224, 1
      %s226 = scalar_select %p223, %s224, %s225
      %p229 = pneg %p223
      %p230 = scmp.eq.s32.totalorder %s25, 1
      %p231 = por %p229, %p230
      %p232 = scmp.ne.s32.totalorder %s224, %s227
      %p233 = scmp.eq.s32.totalorder %s25, 0
      %p234 = por %p232, %p233
      %p235 = scmp.ne.s32.totalorder %s224, %s227
      %p236 = scmp.eq.s32.totalorder %s30, 1
      %p237 = por %p235, %p236
      %p238 = scmp.ne.s32.totalorder %s227, %s228
      %p239 = scmp.eq.s32.totalorder %s30, 0
      %p240 = por %p238, %p239
      %p241 = scmp.ne.s32.totalorder %s227, %s228
      %p242 = scmp.eq.s32.totalorder %s31, 1
      %p243 = por %p241, %p242
      %p245 = scmp.ne.s32.totalorder %s228, %s244
      %p246 = scmp.eq.s32.totalorder %s31, 0
      %p247 = por %p245, %p246
      %p248 = scmp.le.s32.totalorder 1, %s25
      %p249 = scmp.lt.s32.totalorder %s25, 3
      %p250 = pnand %p248, %p249
      %p251 = pneg %p250
      // Predicated region
      $region9: #{tpu_custom_call.1} parent=5 // pred_check
        _
      $region10: #{tpu_custom_call.1} parent=5 // pred_check_branch
        %253 = sbr.rel (%p250) target = $region12
      $region11: #{tpu_custom_call.1} parent=5 // pred_region
        %s254 = ssub.s32 %s25, 1
        // Predicated region
        $region13: #{tpu_custom_call.1} parent=11 // pred_check
          %p255 = pneg %p170
        $region14: #{tpu_custom_call.1} parent=11 // pred_check_branch
          %257 = sbr.rel (%p255) target = $region16
        $region15: #{tpu_custom_call.1} parent=11 // pred_region
          _
        $region16: #{tpu_custom_call.1} parent=11 // pred_fallthru
          _
        // Predicated region
        $region17: #{tpu_custom_call.1} parent=11 // pred_check
          %p258 = pneg %p191
        $region18: #{tpu_custom_call.1} parent=11 // pred_check_branch
          %260 = sbr.rel (%p258) target = $region20
        $region19: #{tpu_custom_call.1} parent=11 // pred_region
          _
        $region20: #{tpu_custom_call.1} parent=11 // pred_fallthru
          _
        // Predicated region
        $region21: #{tpu_custom_call.1} parent=11 // pred_check
          %p261 = pneg %p212
        $region22: #{tpu_custom_call.1} parent=11 // pred_check_branch
          %263 = sbr.rel (%p261) target = $region24
        $region23: #{tpu_custom_call.1} parent=11 // pred_region
          _
        $region24: #{tpu_custom_call.1} parent=11 // pred_fallthru
          _
      $region12: #{tpu_custom_call.1} parent=5 // pred_fallthru
        _
      %p264 = scmp.lt.s32.totalorder %s25, 2
      // Predicated region
      $region25: #{tpu_custom_call.1} parent=5 // pred_check
        %p265 = pneg %p264
      $region26: #{tpu_custom_call.1} parent=5 // pred_check_branch
        %267 = sbr.rel (%p265) target = $region28
      $region27: #{tpu_custom_call.1} parent=5 // pred_region
        // Predicated region
        $region29: #{tpu_custom_call.1} parent=27 // pred_check
          %p268 = pneg %p59
        $region30: #{tpu_custom_call.1} parent=27 // pred_check_branch
          %270 = sbr.rel (%p268) target = $region32
        $region31: #{tpu_custom_call.1} parent=27 // pred_region
          %s271 = sand.u32 %s49, 1
          %s272 = scalar_lea.sflag [#allocation3], %s271
          %s273 = sand.u32 %s49, 1
          %s274 = smul.addr %s273, 16
          %s275 = scalar_lea.vmem [#allocation2], %s274
          %s276 = smul.u32 2, %s33
          %s278 = ssub.s32 256, 256
          %279 = vsyncadd %s272, %s278
          %s280 = smul.addr %s32, 2
          %s281 = sadd.s32 %s276, %s280
          %s282 = smul.addr %s281, 128
          %s283 = scalar_lea.hbm %s0, %s282
          %s285 = sshll.u32 %s275, 4
          %s286 = int_to_ptr.vmem [resolvable:$true] %s285
          %288 = dma.hbm_to_vmem [thread:$0]  %s283, 256, %s286, %s272
        $region32: #{tpu_custom_call.1} parent=27 // pred_fallthru
          _
        // Predicated region
        $region33: #{tpu_custom_call.1} parent=27 // pred_check
          %p289 = pneg %p87
        $region34: #{tpu_custom_call.1} parent=27 // pred_check_branch
          %291 = sbr.rel (%p289) target = $region36
        $region35: #{tpu_custom_call.1} parent=27 // pred_region
          %s292 = sand.u32 %s25, 1
          %s293 = scalar_lea.sflag [#allocation6], %s292
          %s294 = sand.u32 %s77, 1
          %s295 = smul.addr %s294, 16
          %s296 = scalar_lea.vmem [#allocation5], %s295
          %s297 = smul.u32 2, %s33
          %s299 = ssub.s32 256, 256
          %300 = vsyncadd %s293, %s299
          %s301 = smul.addr %s32, 2
          %s302 = sadd.s32 %s297, %s301
          %s303 = smul.addr %s302, 128
          %s304 = scalar_lea.hbm %s1, %s303
          %s306 = sshll.u32 %s296, 4
          %s307 = int_to_ptr.vmem [resolvable:$true] %s306
          %309 = dma.hbm_to_vmem [thread:$0]  %s304, 256, %s307, %s293
        $region36: #{tpu_custom_call.1} parent=27 // pred_fallthru
          _
        // Predicated region
        $region37: #{tpu_custom_call.1} parent=27 // pred_check
          %p310 = pneg %p115
        $region38: #{tpu_custom_call.1} parent=27 // pred_check_branch
          %312 = sbr.rel (%p310) target = $region40
        $region39: #{tpu_custom_call.1} parent=27 // pred_region
          %s313 = sand.u32 %s25, 1
          %s314 = scalar_lea.sflag [#allocation6], %s313
          %s315 = sand.u32 %s105, 1
          %s316 = smul.addr %s315, 16
          %s317 = scalar_lea.vmem [#allocation7], %s316
          %s318 = smul.u32 2, %s33
          %s320 = ssub.s32 256, 256
          %321 = vsyncadd %s314, %s320
          %s322 = smul.addr %s32, 2
          %s323 = sadd.s32 %s318, %s322
          %s324 = smul.addr %s323, 128
          %s325 = scalar_lea.hbm %s2, %s324
          %s327 = sshll.u32 %s317, 4
          %s328 = int_to_ptr.vmem [resolvable:$true] %s327
          %330 = dma.hbm_to_vmem [thread:$0]  %s325, 256, %s328, %s314
        $region40: #{tpu_custom_call.1} parent=27 // pred_fallthru
          _
        // Predicated region
        $region41: #{tpu_custom_call.1} parent=27 // pred_check
          %p331 = pneg %p143
        $region42: #{tpu_custom_call.1} parent=27 // pred_check_branch
          %333 = sbr.rel (%p331) target = $region44
        $region43: #{tpu_custom_call.1} parent=27 // pred_region
          %s334 = sand.u32 %s133, 1
          %s335 = scalar_lea.sflag [#allocation9], %s334
          %s336 = sand.u32 %s133, 1
          %s337 = smul.addr %s336, 16
          %s338 = scalar_lea.vmem [#allocation8], %s337
          %s339 = smul.u32 2, %s33
          %s341 = ssub.s32 256, 256
          %342 = vsyncadd %s335, %s341
          %s343 = smul.addr %s32, 2
          %s344 = sadd.s32 %s339, %s343
          %s345 = smul.addr %s344, 128
          %s346 = scalar_lea.hbm %s3, %s345
          %s348 = sshll.u32 %s338, 4
          %s349 = int_to_ptr.vmem [resolvable:$true] %s348
          %351 = dma.hbm_to_vmem [thread:$0]  %s346, 256, %s349, %s335
        $region44: #{tpu_custom_call.1} parent=27 // pred_fallthru
          _
      $region28: #{tpu_custom_call.1} parent=5 // pred_fallthru
        _
      %p352 = scmp.le.s32.totalorder 1, %s25
      %p353 = scmp.lt.s32.totalorder %s25, 3
      %p354 = pnand %p352, %p353
      %p355 = pneg %p354
      // Predicated region
      $region45: #{tpu_custom_call.1} parent=5 // pred_check
        _
      $region46: #{tpu_custom_call.1} parent=5 // pred_check_branch
        %357 = sbr.rel (%p354) target = $region48
      $region47: #{tpu_custom_call.1} parent=5 // pred_region
        %s358 = ssub.s32 %s25, 1
        %s359 = sand.u32 %s52, 1
        %s360 = scalar_lea.sflag [#allocation3], %s359
        %s361 = sand.u32 %s52, 1
        %s362 = smul.addr %s361, 16
        %s363 = scalar_lea.vmem [#allocation2], %s362
        // Predicated region
        $region49: #{tpu_custom_call.1} parent=47 // pred_check
          %p364 = pneg %p65
        $region50: #{tpu_custom_call.1} parent=47 // pred_check_branch
          %366 = sbr.rel (%p364) target = $region52
        $region51: #{tpu_custom_call.1} parent=47 // pred_region
          %367 = dma.done %s360, 256
        $region52: #{tpu_custom_call.1} parent=47 // pred_fallthru
          _
        %s368 = sand.u32 %s30, 1
        %s369 = scalar_lea.sflag [#allocation6], %s368
        %s370 = sand.u32 %s80, 1
        %s371 = smul.addr %s370, 16
        %s372 = scalar_lea.vmem [#allocation5], %s371
        // Predicated region
        $region53: #{tpu_custom_call.1} parent=47 // pred_check
          %p373 = pneg %p93
        $region54: #{tpu_custom_call.1} parent=47 // pred_check_branch
          %375 = sbr.rel (%p373) target = $region56
        $region55: #{tpu_custom_call.1} parent=47 // pred_region
          %376 = dma.done %s369, 256
        $region56: #{tpu_custom_call.1} parent=47 // pred_fallthru
          _
        %s377 = sand.u32 %s30, 1
        %s378 = scalar_lea.sflag [#allocation6], %s377
        %s379 = sand.u32 %s108, 1
        %s380 = smul.addr %s379, 16
        %s381 = scalar_lea.vmem [#allocation7], %s380
        // Predicated region
        $region57: #{tpu_custom_call.1} parent=47 // pred_check
          %p382 = pneg %p121
        $region58: #{tpu_custom_call.1} parent=47 // pred_check_branch
          %384 = sbr.rel (%p382) target = $region60
        $region59: #{tpu_custom_call.1} parent=47 // pred_region
          %385 = dma.done %s378, 256
        $region60: #{tpu_custom_call.1} parent=47 // pred_fallthru
          _
        %s386 = sand.u32 %s136, 1
        %s387 = scalar_lea.sflag [#allocation9], %s386
        %s388 = sand.u32 %s136, 1
        %s389 = smul.addr %s388, 16
        %s390 = scalar_lea.vmem [#allocation8], %s389
        // Predicated region
        $region61: #{tpu_custom_call.1} parent=47 // pred_check
          %p391 = pneg %p149
        $region62: #{tpu_custom_call.1} parent=47 // pred_check_branch
          %393 = sbr.rel (%p391) target = $region64
        $region63: #{tpu_custom_call.1} parent=47 // pred_region
          %394 = dma.done %s387, 256
        $region64: #{tpu_custom_call.1} parent=47 // pred_fallthru
          _
        %s395 = sand.u32 %s52, 1
        %s396 = scalar_lea.sflag [#allocation3], %s395
        %s397 = sand.u32 %s52, 1
        %s398 = smul.addr %s397, 16
        %s399 = scalar_lea.vmem [#allocation2], %s398
        %p400 = pneg %p65
        %p401 = pneg %p62
        %s402 = sand.u32 %s30, 1
        %s403 = scalar_lea.sflag [#allocation6], %s402
        %s404 = sand.u32 %s80, 1
        %s405 = smul.addr %s404, 16
        %s406 = scalar_lea.vmem [#allocation5], %s405
        %p407 = pneg %p93
        %p408 = pneg %p90
        %s409 = sand.u32 %s30, 1
        %s410 = scalar_lea.sflag [#allocation6], %s409
        %s411 = sand.u32 %s108, 1
        %s412 = smul.addr %s411, 16
        %s413 = scalar_lea.vmem [#allocation7], %s412
        %p414 = pneg %p121
        %p415 = pneg %p118
        %s416 = sand.u32 %s136, 1
        %s417 = scalar_lea.sflag [#allocation9], %s416
        %s418 = sand.u32 %s136, 1
        %s419 = smul.addr %s418, 16
        %s420 = scalar_lea.vmem [#allocation8], %s419
        %p421 = pneg %p149
        %p422 = pneg %p146
        %p423 = pneg %p170
        %p424 = pneg %p167
        %p425 = pneg %p191
        %p426 = pneg %p188
        %p427 = pneg %p212
        %p428 = pneg %p209
        %p429 = pneg %p240
        %p430 = pneg %p237
        %s431 = sand.u32 %s227, 1
        %s432 = scalar_lea.sflag [#allocation4], %s431
        %s433 = sand.u32 %s227, 1
        %s434 = smul.addr %s433, 16
        %s435 = scalar_lea.vmem [#allocation10], %s434
        %s436 = smul.u32 2, %s35
        %s437 = smul.u32 2, %s35
        %s438 = smul.u32 2, %s35
        %s439 = smul.u32 2, %s35
        %s440 = smul.u32 2, %s35
        %v441 = vld [vmem:[%s363] sm:$0xff]
        %v442 = vld [vmem:[%s363 + $0x8] sm:$0xff]
        %v443 = vld [vmem:[%s372] sm:$0xff]
        %v444 = vld [vmem:[%s372 + $0x8] sm:$0xff]
        %v445 = vld [vmem:[%s381] sm:$0xff]
        %v446 = vld [vmem:[%s381 + $0x8] sm:$0xff]
        %v447 = vld [vmem:[%s390] sm:$0xff]
        %v448 = vld [vmem:[%s390 + $0x8] sm:$0xff]
        %v449 = vld [vmem:[%s4] sm:$0xff]
        %vm450 = vcmask 261120
        %v452 = vsel %vm450, %v449, 0
        %454 = vmatprep.subr.mxu0 %v442
        %455 = vmatpush1.msra.mxu0 %v441
        %456 = vmatprep.subr.mxu0 %v444
        %457 = vmatpush1.msra.mxu0 %v443
        %458 = vmatprep.subr.mxu0 %v446
        %459 = vmatpush1.msra.mxu0 %v445
        %460 = vmatprep.subr.mxu0 %v448
        %461 = vmatpush1.msra.mxu0 %v447
        %462 = vmatprep.subr.mxu0 0.0
        %463 = vmatpush1.msra.mxu0 0.0
        %464 = vmatprep.subr.mxu0 0.0
        %465 = vmatpush1.msra.mxu0 0.0
        %466 = vmatprep.subr.mxu0 0.0
        %467 = vmatpush1.msra.mxu0 0.0
        %468 = vmatprep.subr.mxu0 0.0
        %469 = vmatpush1.msra.mxu0 0.0
        %470 = vmatprep.subr.mxu0 0.0
        %471 = vmatpush1.msra.mxu0 0.0
        %472 = vmatprep.subr.mxu0 0.0
        %473 = vmatpush1.msra.mxu0 0.0
        %474 = vmatprep.subr.mxu0 0.0
        %475 = vmatpush1.msra.mxu0 0.0
        %476 = vmatprep.subr.mxu0 0.0
        %477 = vmatpush1.msra.mxu0 0.0
        %478 = vmatprep.subr.mxu0 0.0
        %479 = vmatpush1.msra.mxu0 0.0
        %480 = vmatprep.subr.mxu0 0.0
        %481 = vmatpush1.msra.mxu0 0.0
        %482 = vmatprep.subr.mxu0 0.0
        %483 = vmatpush1.msra.mxu0 0.0
        %484 = vmatprep.subr.mxu0 0.0
        %485 = vmatpush1.msra.mxu0 0.0
        %486 = vmatprep.subr.mxu0 0.0
        %487 = vmatpush1.msra.mxu0 0.0
        %488 = vmatprep.subr.mxu0 0.0
        %489 = vmatpush1.msra.mxu0 0.0
        %490 = vmatprep.subr.mxu0 0.0
        %491 = vmatpush1.msra.mxu0 0.0
        %492 = vmatprep.subr.mxu0 0.0
        %493 = vmatpush1.msra.mxu0 0.0
        %494 = vmatprep.subr.mxu0 0.0
        %495 = vmatpush1.msra.mxu0 0.0
        %496 = vmatprep.subr.mxu0 0.0
        %497 = vmatpush1.msra.mxu0 0.0
        %498 = vmatprep.subr.mxu0 0.0
        %499 = vmatpush1.msra.mxu0 0.0
        %500 = vmatprep.subr.mxu0 0.0
        %501 = vmatpush1.msra.mxu0 0.0
        %502 = vmatprep.subr.mxu0 0.0
        %503 = vmatpush1.msra.mxu0 0.0
        %504 = vmatprep.subr.mxu0 0.0
        %505 = vmatpush1.msra.mxu0 0.0
        %506 = vmatprep.subr.mxu0 0.0
        %507 = vmatpush1.msra.mxu0 0.0
        %508 = vmatprep.subr.mxu0 0.0
        %509 = vmatpush1.msra.mxu0 0.0
        %510 = vmatprep.subr.mxu0 0.0
        %511 = vmatpush1.msra.mxu0 0.0
        %512 = vmatprep.subr.mxu0 0.0
        %513 = vmatpush1.msra.mxu0 0.0
        %514 = vmatprep.subr.mxu0 0.0
        %515 = vmatpush1.msra.mxu0 0.0
        %516 = vmatprep.subr.mxu0 0.0
        %517 = vmatpush1.msra.mxu0 0.0
        %518 = vmatprep.mubr.f32.mxu0 0.0
        %519 = vmatmul.mubr.f32.gmra.mrb[0].mxu0 %v452
        %v520 = vpop.f32.mrb[0].mxu0
        %v521 = vadd.f32 0.0, %v520
        %v522 = vpop.f32.mrb[0].mxu0
        %v523 = vadd.f32 0.0, %v522
        %524 = vdwg.mxu0
        %v525 = vmax.f32 %v521, 0.0
        %v526 = vmax.f32 %v523, 0.0
        %v527 = vld [vmem:[%s5] sm:$0xff]
        %v528 = vld [vmem:[%s6] sm:$0xff]
        %530 = vset.pattern.permute.xlu0 0
        %531 = vperm.xlu0 %530, %v528
        %v532 = vpop.permute.xlu0 %531
        %vm534 = vcmask 64512
        %v536 = vsel %vm534, %v527, 0
        %538 = vmatprep.subr.mxu0 %v526
        %539 = vmatpush1.msra.mxu0 %v525
        %540 = vmatprep.subr.mxu0 0.0
        %541 = vmatpush1.msra.mxu0 0.0
        %542 = vmatprep.subr.mxu0 0.0
        %543 = vmatpush1.msra.mxu0 0.0
        %544 = vmatprep.subr.mxu0 0.0
        %545 = vmatpush1.msra.mxu0 0.0
        %546 = vmatprep.subr.mxu0 0.0
        %547 = vmatpush1.msra.mxu0 0.0
        %548 = vmatprep.subr.mxu0 0.0
        %549 = vmatpush1.msra.mxu0 0.0
        %550 = vmatprep.subr.mxu0 0.0
        %551 = vmatpush1.msra.mxu0 0.0
        %552 = vmatprep.subr.mxu0 0.0
        %553 = vmatpush1.msra.mxu0 0.0
        %554 = vmatprep.subr.mxu0 0.0
        %555 = vmatpush1.msra.mxu0 0.0
        %556 = vmatprep.subr.mxu0 0.0
        %557 = vmatpush1.msra.mxu0 0.0
        %558 = vmatprep.subr.mxu0 0.0
        %559 = vmatpush1.msra.mxu0 0.0
        %560 = vmatprep.subr.mxu0 0.0
        %561 = vmatpush1.msra.mxu0 0.0
        %562 = vmatprep.subr.mxu0 0.0
        %563 = vmatpush1.msra.mxu0 0.0
        %564 = vmatprep.subr.mxu0 0.0
        %565 = vmatpush1.msra.mxu0 0.0
        %566 = vmatprep.subr.mxu0 0.0
        %567 = vmatpush1.msra.mxu0 0.0
        %568 = vmatprep.subr.mxu0 0.0
        %569 = vmatpush1.msra.mxu0 0.0
        %570 = vmatprep.subr.mxu0 0.0
        %571 = vmatpush1.msra.mxu0 0.0
        %572 = vmatprep.subr.mxu0 0.0
        %573 = vmatpush1.msra.mxu0 0.0
        %574 = vmatprep.subr.mxu0 0.0
        %575 = vmatpush1.msra.mxu0 0.0
        %576 = vmatprep.subr.mxu0 0.0
        %577 = vmatpush1.msra.mxu0 0.0
        %578 = vmatprep.subr.mxu0 0.0
        %579 = vmatpush1.msra.mxu0 0.0
        %580 = vmatprep.subr.mxu0 0.0
        %581 = vmatpush1.msra.mxu0 0.0
        %582 = vmatprep.subr.mxu0 0.0
        %583 = vmatpush1.msra.mxu0 0.0
        %584 = vmatprep.subr.mxu0 0.0
        %585 = vmatpush1.msra.mxu0 0.0
        %586 = vmatprep.subr.mxu0 0.0
        %587 = vmatpush1.msra.mxu0 0.0
        %588 = vmatprep.subr.mxu0 0.0
        %589 = vmatpush1.msra.mxu0 0.0
        %590 = vmatprep.subr.mxu0 0.0
        %591 = vmatpush1.msra.mxu0 0.0
        %592 = vmatprep.subr.mxu0 0.0
        %593 = vmatpush1.msra.mxu0 0.0
        %594 = vmatprep.subr.mxu0 0.0
        %595 = vmatpush1.msra.mxu0 0.0
        %596 = vmatprep.subr.mxu0 0.0
        %597 = vmatpush1.msra.mxu0 0.0
        %598 = vmatprep.subr.mxu0 0.0
        %599 = vmatpush1.msra.mxu0 0.0
        %600 = vmatprep.subr.mxu0 0.0
        %601 = vmatpush1.msra.mxu0 0.0
        %602 = vmatprep.mubr.f32.mxu0 0.0
        %603 = vmatmul.mubr.f32.gmra.mrb[0].mxu0 %v536
        %v604 = vpop.f32.mrb[0].mxu0
        %v605 = vadd.f32 %v532, %v604
        %v606 = vpop.f32.mrb[0].mxu0
        %v607 = vadd.f32 %v532, %v606
        %608 = vdwg.mxu0
        %609 = vst [vmem:[%s435] sm:$0xff] %v605
        %610 = vst [vmem:[%s435 + $0x8] sm:$0xff] %v607
        %s611 = sand.u32 %s227, 1
        %s612 = scalar_lea.sflag [#allocation4], %s611
        %s613 = sand.u32 %s227, 1
        %s614 = smul.addr %s613, 16
        %s615 = scalar_lea.vmem [#allocation10], %s614
        // Predicated region
        $region65: #{tpu_custom_call.1} parent=47 // pred_check
          %p616 = pneg %p237
        $region66: #{tpu_custom_call.1} parent=47 // pred_check_branch
          %618 = sbr.rel (%p616) target = $region68
        $region67: #{tpu_custom_call.1} parent=47 // pred_region
          %s619 = smul.u32 2, %s35
          %s621 = ssub.s32 256, 256
          %622 = vsyncadd %s612, %s621
          %s623 = smul.addr %s34, 2
          %s624 = sadd.s32 %s619, %s623
          %s625 = smul.addr %s624, 128
          %s626 = scalar_lea.hbm %s7, %s625
          %s628 = sshll.u32 %s615, 4
          %s629 = int_to_ptr.vmem [resolvable:$true] %s628
          %631 = dma.vmem_to_hbm [thread:$0]  %s629, 256, %s626, %s612
        $region68: #{tpu_custom_call.1} parent=47 // pred_fallthru
          _
      $region48: #{tpu_custom_call.1} parent=5 // pred_fallthru
        _
      %p632 = scmp.le.s32.totalorder 2, %s25
      // Predicated region
      $region69: #{tpu_custom_call.1} parent=5 // pred_check
        %p633 = pneg %p632
      $region70: #{tpu_custom_call.1} parent=5 // pred_check_branch
        %635 = sbr.rel (%p633) target = $region72
      $region71: #{tpu_custom_call.1} parent=5 // pred_region
        %s636 = ssub.s32 %s25, 2
        // Predicated region
        $region73: #{tpu_custom_call.1} parent=71 // pred_check
          %p637 = pneg %p243
        $region74: #{tpu_custom_call.1} parent=71 // pred_check_branch
          %639 = sbr.rel (%p637) target = $region76
        $region75: #{tpu_custom_call.1} parent=71 // pred_region
          %s640 = sand.u32 %s228, 1
          %s641 = scalar_lea.sflag [#allocation4], %s640
          %s642 = sand.u32 %s228, 1
          %s643 = smul.addr %s642, 16
          %s644 = scalar_lea.vmem [#allocation10], %s643
          %645 = dma.done %s641, 256
        $region76: #{tpu_custom_call.1} parent=71 // pred_fallthru
          _
      $region72: #{tpu_custom_call.1} parent=5 // pred_fallthru
        _
    $region6: #{tpu_custom_call.1} parent=1 // loop_footer
      %s29 = sadd.s32 1, %s25
    $region7: #{tpu_custom_call.1} parent=1 // loop_footer_branch
      %24 = sbr.rel target = $region3
    $region8: #{tpu_custom_call.1} parent=1 // loop_exit
      _
    %646 = vsyncpa [#allocation3], 1
    %s647 = scalar_lea.sflag [#allocation3], 1
    %648 = vsyncpa %s647, 1
    %649 = vsyncpa [#allocation6], 1
    %s650 = scalar_lea.sflag [#allocation6], 1
    %651 = vsyncpa %s650, 1
    %652 = vsyncpa [#allocation9], 1
    %s653 = scalar_lea.sflag [#allocation9], 1
    %654 = vsyncpa %s653, 1
    %655 = vsyncpa [#allocation4], 1
    %s656 = scalar_lea.sflag [#allocation4], 1
    %657 = vsyncpa %s656, 1

</llo_original>
